<compile_context>
chip_gen: v7x
topology: tpu7x:2x2x1
jax: 0.10.0
libtpu: 0.0.40
codegen_flags: <defaults>
</compile_context>

<pallas_src>
import functools

import jax
import jax.numpy as jnp
from jax import lax
from jax.experimental import pallas as pl
from jax.experimental.pallas import tpu as pltpu

_EPS = 1e-12


def spectral_norm_linear_kernel(x_ref, wt_ref, u_ref, b_ref,
                                y_ref, u_out_ref, v_out_ref,
                                u_sc, v_sc, inv_sigma_sc,
                                *, power_iterations):
    # x_ref : (TB, Din)  current batch tile (native dtype)
    # wt_ref: (Din, H)   w_bar^T, resident across all grid steps
    # u_ref : (1, H)     persistent left singular-vector estimate (row)
    # b_ref : (1, H)     bias of the wrapped Linear
    # u_sc, v_sc : VMEM f32 scratch (1,H)/(1,Din); inv_sigma_sc: SMEM (1,1) f32
    i = pl.program_id(0)

    # ---- power iteration + sigma: computed exactly once, on grid step 0 ----
    @pl.when(i == 0)
    def _power_iteration():
        wt = wt_ref[...]                                   # (Din, H) native
        u = u_ref[...].astype(jnp.float32)                 # (1, H)
        v = jnp.zeros((1, wt_ref.shape[0]), jnp.float32)   # (1, Din)
        wv = u
        for _ in range(power_iterations):
            # v = l2normalize(W^T u); as a row vector: contract the H axes of
            # u (1,H) and wt (Din,H)  -> (1, Din).  Single weight copy, no
            # in-kernel transpose.
            v_raw = lax.dot_general(
                u.astype(wt.dtype), wt,
                dimension_numbers=(((1,), (1,)), ((), ())),
                preferred_element_type=jnp.float32)        # (1, Din)
            v = v_raw * (1.0 / (jnp.sqrt(jnp.sum(v_raw * v_raw)) + _EPS))
            # u = l2normalize(W v); as a row vector: v (1,Din) @ wt (Din,H)
            wv = jnp.dot(v.astype(wt.dtype), wt,
                         preferred_element_type=jnp.float32)  # (1, H)
            u = wv * (1.0 / (jnp.sqrt(jnp.sum(wv * wv)) + _EPS))
        # sigma = u . (W v), reusing W v from the final iteration (as PyTorch).
        sigma = jnp.sum(u * wv)
        inv_sigma_sc[0, 0] = 1.0 / sigma
        u_sc[...] = u
        v_sc[...] = v

    # ---- wrapped Linear with the normalized weight, one batch tile ----
    # Native-dtype operands straight into the MXU, f32 accumulation.
    y = jnp.dot(x_ref[...], wt_ref[...], preferred_element_type=jnp.float32)
    y = y * inv_sigma_sc[0, 0] + b_ref[...].astype(jnp.float32)
    y_ref[...] = y.astype(y_ref.dtype)

    # ---- write the updated power-iteration state once, on the last step ----
    @pl.when(i == pl.num_programs(0) - 1)
    def _write_state():
        u_out_ref[...] = u_sc[...].astype(u_out_ref.dtype)
        v_out_ref[...] = v_sc[...].astype(v_out_ref.dtype)


def spectral_norm_linear(x, w_bar_t, u, bias, *, power_iterations=1,
                         block_b=256):
    """SpectralNorm(Linear) forward.

    x: (B, Din); w_bar_t: (Din, H)  (= w_bar^T, persisted pre-transposed);
    u: (H,); bias: (H,).  Returns (y, u_new, v_new).
    """
    assert power_iterations >= 1
    B, din = x.shape
    din_w, H = w_bar_t.shape
    assert din_w == din and u.shape == (H,) and bias.shape == (H,)

    # Batch tiling: stream x/y tiles while the weight stays resident.
    if B <= block_b:
        tb = B
        x_p = x
    else:
        tb = block_b                       # multiple of 8 sublanes
        pad = (-B) % tb
        x_p = jnp.pad(x, ((0, pad), (0, 0))) if pad else x
    padded_b = x_p.shape[0]
    num_tiles = padded_b // tb

    u2 = u.reshape(1, H).astype(jnp.float32)
    b2 = bias.reshape(1, H)

    x_item = jnp.dtype(x.dtype).itemsize
    w_bytes = w_bar_t.size * jnp.dtype(w_bar_t.dtype).itemsize
    # Resident weight + double-buffered x/y tiles + small vectors + headroom.
    vmem_limit = int(min(
        w_bytes + 2 * tb * (din + H) * x_item + 8 * (H + din) * 4 + (4 << 20),
        64 << 20))

    cost = pl.CostEstimate(
        flops=2 * padded_b * din * H + power_iterations * 4 * din * H + 2 * H,
        transcendentals=2 * power_iterations,
        bytes_accessed=(x_p.size * x_item + w_bytes
                        + u2.size * 4 + b2.size * jnp.dtype(b2.dtype).itemsize
                        + padded_b * H * x_item + (H + din) * 4),
    )

    kernel = functools.partial(spectral_norm_linear_kernel,
                               power_iterations=power_iterations)

    y, u_new, v_new = pl.pallas_call(
        kernel,
        out_shape=(
            jax.ShapeDtypeStruct((padded_b, H), x.dtype),
            jax.ShapeDtypeStruct((1, H), jnp.float32),
            jax.ShapeDtypeStruct((1, din), jnp.float32),
        ),
        grid_spec=pltpu.PrefetchScalarGridSpec(
            num_scalar_prefetch=0,
            grid=(num_tiles,),
            in_specs=[
                pl.BlockSpec((tb, din), lambda i: (i, 0)),   # x tile (streams)
                pl.BlockSpec((din, H), lambda i: (0, 0)),    # w_bar^T (resident)
                pl.BlockSpec((1, H), lambda i: (0, 0)),      # u (resident)
                pl.BlockSpec((1, H), lambda i: (0, 0)),      # bias (resident)
            ],
            out_specs=[
                pl.BlockSpec((tb, H), lambda i: (i, 0)),     # y tile (streams)
                pl.BlockSpec((1, H), lambda i: (0, 0)),      # u_new
                pl.BlockSpec((1, din), lambda i: (0, 0)),    # v_new
            ],
            scratch_shapes=[
                pltpu.VMEM((1, H), jnp.float32),             # u scratch
                pltpu.VMEM((1, din), jnp.float32),           # v scratch
                pltpu.SMEM((1, 1), jnp.float32),             # inv_sigma
            ],
        ),
        compiler_params=pltpu.CompilerParams(
            dimension_semantics=("arbitrary",),
            vmem_limit_bytes=vmem_limit),
        cost_estimate=cost,
    )(x_p, w_bar_t, u2, b2)

    return y[:B], u_new.reshape(H), v_new.reshape(din)


def spectral_norm_linear_ref(x, w_bar, u, bias, *, power_iterations=1):
    """Pure-JAX reference mirroring the PyTorch SpectralNorm(Linear) forward."""
    w = w_bar.astype(jnp.float32)
    u = u.astype(jnp.float32)
    v = None
    for _ in range(power_iterations):
        v = w.T @ u
        v = v / (jnp.linalg.norm(v) + _EPS)
        wv = w @ v
        u = wv / (jnp.linalg.norm(wv) + _EPS)
    sigma = u @ (w @ v)
    w_sn = w / sigma
    y = x.astype(jnp.float32) @ w_sn.T + bias.astype(jnp.float32)
    return y.astype(x.dtype), u, v


if __name__ == "__main__":
    # Small, lane-dense shapes consistent with SpectralNorm(Linear(128 -> 128)).
    B, DIN, DOUT = 16, 128, 128
    POWER_ITERATIONS = 1

    key = jax.random.PRNGKey(0)
    kx, kw, ku, kb = jax.random.split(key, 4)

    x = jax.random.normal(kx, (B, DIN), dtype=jnp.float32)
    w_bar = jax.random.normal(kw, (DOUT, DIN), dtype=jnp.float32) * 0.1
    bias = jax.random.normal(kb, (DOUT,), dtype=jnp.float32) * 0.1
    u0 = jax.random.normal(ku, (DOUT,), dtype=jnp.float32)
    u0 = u0 / (jnp.linalg.norm(u0) + _EPS)   # as in SpectralNorm._make_params

    # One-time setup: the weight is *persisted* pre-transposed (Din, H) so no
    # per-call transpose (and no second copy) is ever shipped to the kernel.
    w_bar_t = jnp.transpose(w_bar)

    # block_b=8 -> grid=(2,) so the batch tiling / step-0 hoist is exercised.
    y, u_new, v_new = spectral_norm_linear(
        x, w_bar_t, u0, bias, power_iterations=POWER_ITERATIONS, block_b=8)
    y = jax.block_until_ready(y)

    y_ref, u_ref, v_ref = spectral_norm_linear_ref(
        x, w_bar, u0, bias, power_iterations=POWER_ITERATIONS)

    assert y.shape == (B, DOUT)
    assert jnp.allclose(y, y_ref, atol=1e-4, rtol=1e-4)
    assert jnp.allclose(u_new, u_ref, atol=1e-4, rtol=1e-4)
    assert jnp.allclose(v_new, v_ref, atol=1e-4, rtol=1e-4)

    print("KERNEL_OK")
</pallas_src>

<mosaic_0001>
module attributes {stable_mosaic.version = 11 : i64} {
  func.func @spectral_norm_linear_kernel(%arg0: i32, %arg1: memref<8x128xf32, #tpu.memory_space<vmem>>, %arg2: memref<128x128xf32, #tpu.memory_space<vmem>>, %arg3: memref<1x128xf32, #tpu.memory_space<vmem>>, %arg4: memref<1x128xf32, #tpu.memory_space<vmem>>, %arg5: memref<8x128xf32, #tpu.memory_space<vmem>>, %arg6: memref<1x128xf32, #tpu.memory_space<vmem>>, %arg7: memref<1x128xf32, #tpu.memory_space<vmem>>, %arg8: memref<1x128xf32, #tpu.memory_space<vmem>>, %arg9: memref<1x128xf32, #tpu.memory_space<vmem>>, %arg10: memref<1x1xf32, #tpu.memory_space<smem>>) attributes {dimension_semantics = [#tpu.dimension_semantics<arbitrary>], iteration_bounds = array<i64: 2>, scalar_prefetch = 0 : i64, scratch_operands = 3 : i64, tpu.core_type = #tpu.core_type<tc>, window_params = [{transform_indices = @transform_0, window_bounds = array<i64: 8, 128>}, {pipeline_mode = #tpu.pipeline_mode<synchronous>, transform_indices = @transform_1, window_bounds = array<i64: 128, 128>}, {pipeline_mode = #tpu.pipeline_mode<synchronous>, transform_indices = @transform_2, window_bounds = array<i64: 1, 128>}, {pipeline_mode = #tpu.pipeline_mode<synchronous>, transform_indices = @transform_3, window_bounds = array<i64: 1, 128>}, {transform_indices = @transform_4, window_bounds = array<i64: 8, 128>}, {pipeline_mode = #tpu.pipeline_mode<synchronous>, transform_indices = @transform_5, window_bounds = array<i64: 1, 128>}, {pipeline_mode = #tpu.pipeline_mode<synchronous>, transform_indices = @transform_6, window_bounds = array<i64: 1, 128>}]} {
    %c0_i32 = arith.constant 0 : i32
    %0 = arith.cmpi eq, %arg0, %c0_i32 : i32
    %1 = arith.extui %0 : i1 to i32
    %c0_i32_0 = arith.constant 0 : i32
    %2 = arith.cmpi ne, %1, %c0_i32_0 : i32
    scf.if %2 {
      %c0_11 = arith.constant 0 : index
      %c0_12 = arith.constant 0 : index
      %16 = vector.load %arg2[%c0_11, %c0_12] : memref<128x128xf32, #tpu.memory_space<vmem>>, vector<128x128xf32>
      %c0_13 = arith.constant 0 : index
      %c0_14 = arith.constant 0 : index
      %17 = vector.load %arg3[%c0_13, %c0_14] : memref<1x128xf32, #tpu.memory_space<vmem>>, vector<1x128xf32>
      %cst_15 = arith.constant dense<0.000000e+00> : vector<1x128xf32>
      %18 = tpu.matmul %17, %16, %cst_15 {dimension_numbers = #tpu.dot_dimension_numbers<[1], [1], [0], [0], [0, 0, 1, 0], [], []>} : vector<1x128xf32>, vector<128x128xf32>, vector<1x128xf32> -> vector<1x128xf32>
      %19 = arith.mulf %18, %18 : vector<1x128xf32>
      %20 = vector.shape_cast %19 : vector<1x128xf32> to vector<1x1x128xf32>
      %cst_16 = arith.constant dense<0.000000e+00> : vector<1xf32>
      %21 = vector.multi_reduction <add>, %20, %cst_16 [1, 2] : vector<1x1x128xf32> to vector<1xf32>
      %22 = vector.shape_cast %21 : vector<1xf32> to vector<1x1x1xf32>
      %23 = vector.extract %22[0, 0, 0] : f32 from vector<1x1x1xf32>
      %24 = math.sqrt %23 : f32
      %cst_17 = arith.constant 9.99999996E-13 : f32
      %25 = arith.addf %24, %cst_17 : f32
      %cst_18 = arith.constant 1.000000e+00 : f32
      %26 = arith.divf %cst_18, %25 : f32
      %27 = vector.broadcast %26 : f32 to vector<1x128xf32>
      %28 = arith.mulf %18, %27 : vector<1x128xf32>
      %cst_19 = arith.constant dense<0.000000e+00> : vector<1x128xf32>
      %29 = tpu.matmul %28, %16, %cst_19 {dimension_numbers = #tpu.dot_dimension_numbers<[1], [0], [0], [1], [0, 0, 1, 1], [], []>} : vector<1x128xf32>, vector<128x128xf32>, vector<1x128xf32> -> vector<1x128xf32>
      %30 = arith.mulf %29, %29 : vector<1x128xf32>
      %31 = vector.shape_cast %30 : vector<1x128xf32> to vector<1x1x128xf32>
      %cst_20 = arith.constant dense<0.000000e+00> : vector<1xf32>
      %32 = vector.multi_reduction <add>, %31, %cst_20 [1, 2] : vector<1x1x128xf32> to vector<1xf32>
      %33 = vector.shape_cast %32 : vector<1xf32> to vector<1x1x1xf32>
      %34 = vector.extract %33[0, 0, 0] : f32 from vector<1x1x1xf32>
      %35 = math.sqrt %34 : f32
      %cst_21 = arith.constant 9.99999996E-13 : f32
      %36 = arith.addf %35, %cst_21 : f32
      %cst_22 = arith.constant 1.000000e+00 : f32
      %37 = arith.divf %cst_22, %36 : f32
      %38 = vector.broadcast %37 : f32 to vector<1x128xf32>
      %39 = arith.mulf %29, %38 : vector<1x128xf32>
      %40 = arith.mulf %39, %29 : vector<1x128xf32>
      %41 = vector.shape_cast %40 : vector<1x128xf32> to vector<1x1x128xf32>
      %cst_23 = arith.constant dense<0.000000e+00> : vector<1xf32>
      %42 = vector.multi_reduction <add>, %41, %cst_23 [1, 2] : vector<1x1x128xf32> to vector<1xf32>
      %43 = vector.shape_cast %42 : vector<1xf32> to vector<1x1x1xf32>
      %44 = vector.extract %43[0, 0, 0] : f32 from vector<1x1x1xf32>
      %cst_24 = arith.constant 1.000000e+00 : f32
      %45 = arith.divf %cst_24, %44 : f32
      %c0_25 = arith.constant 0 : index
      %c0_26 = arith.constant 0 : index
      %46 = memref.load %arg10[%c0_25, %c0_26] : memref<1x1xf32, #tpu.memory_space<smem>>
      memref.store %45, %arg10[%c0_25, %c0_26] : memref<1x1xf32, #tpu.memory_space<smem>>
      %c0_27 = arith.constant 0 : index
      %c0_28 = arith.constant 0 : index
      %47 = vector.load %arg8[%c0_27, %c0_28] : memref<1x128xf32, #tpu.memory_space<vmem>>, vector<1x128xf32>
      tpu.vector_store %arg8[%c0_27, %c0_28], %39 {strides = array<i32>} : memref<1x128xf32, #tpu.memory_space<vmem>>, vector<1x128xf32>,
      %c0_29 = arith.constant 0 : index
      %c0_30 = arith.constant 0 : index
      %48 = vector.load %arg9[%c0_29, %c0_30] : memref<1x128xf32, #tpu.memory_space<vmem>>, vector<1x128xf32>
      tpu.vector_store %arg9[%c0_29, %c0_30], %28 {strides = array<i32>} : memref<1x128xf32, #tpu.memory_space<vmem>>, vector<1x128xf32>,
    } else {
    }
    %c0 = arith.constant 0 : index
    %c0_1 = arith.constant 0 : index
    %3 = vector.load %arg1[%c0, %c0_1] : memref<8x128xf32, #tpu.memory_space<vmem>>, vector<8x128xf32>
    %c0_2 = arith.constant 0 : index
    %c0_3 = arith.constant 0 : index
    %4 = vector.load %arg2[%c0_2, %c0_3] : memref<128x128xf32, #tpu.memory_space<vmem>>, vector<128x128xf32>
    %cst = arith.constant dense<0.000000e+00> : vector<8x128xf32>
    %5 = tpu.matmul %3, %4, %cst {dimension_numbers = #tpu.dot_dimension_numbers<[1], [0], [0], [1], [0, 0, 1, 1], [], []>} : vector<8x128xf32>, vector<128x128xf32>, vector<8x128xf32> -> vector<8x128xf32>
    %c0_4 = arith.constant 0 : index
    %c0_5 = arith.constant 0 : index
    %6 = memref.load %arg10[%c0_4, %c0_5] : memref<1x1xf32, #tpu.memory_space<smem>>
    %7 = vector.broadcast %6 : f32 to vector<8x128xf32>
    %8 = arith.mulf %5, %7 : vector<8x128xf32>
    %c0_6 = arith.constant 0 : index
    %c0_7 = arith.constant 0 : index
    %9 = vector.load %arg4[%c0_6, %c0_7] : memref<1x128xf32, #tpu.memory_space<vmem>>, vector<1x128xf32>
    %10 = vector.broadcast %9 : vector<1x128xf32> to vector<8x128xf32>
    %11 = arith.addf %8, %10 : vector<8x128xf32>
    %c0_8 = arith.constant 0 : index
    %c0_9 = arith.constant 0 : index
    %12 = vector.load %arg5[%c0_8, %c0_9] : memref<8x128xf32, #tpu.memory_space<vmem>>, vector<8x128xf32>
    tpu.vector_store %arg5[%c0_8, %c0_9], %11 {strides = array<i32>} : memref<8x128xf32, #tpu.memory_space<vmem>>, vector<8x128xf32>,
    %c1_i32 = arith.constant 1 : i32
    %13 = arith.cmpi eq, %arg0, %c1_i32 : i32
    %14 = arith.extui %13 : i1 to i32
    %c0_i32_10 = arith.constant 0 : i32
    %15 = arith.cmpi ne, %14, %c0_i32_10 : i32
    scf.if %15 {
      %c0_11 = arith.constant 0 : index
      %c0_12 = arith.constant 0 : index
      %16 = vector.load %arg8[%c0_11, %c0_12] : memref<1x128xf32, #tpu.memory_space<vmem>>, vector<1x128xf32>
      %c0_13 = arith.constant 0 : index
      %c0_14 = arith.constant 0 : index
      %17 = vector.load %arg6[%c0_13, %c0_14] : memref<1x128xf32, #tpu.memory_space<vmem>>, vector<1x128xf32>
      tpu.vector_store %arg6[%c0_13, %c0_14], %16 {strides = array<i32>} : memref<1x128xf32, #tpu.memory_space<vmem>>, vector<1x128xf32>,
      %c0_15 = arith.constant 0 : index
      %c0_16 = arith.constant 0 : index
      %18 = vector.load %arg9[%c0_15, %c0_16] : memref<1x128xf32, #tpu.memory_space<vmem>>, vector<1x128xf32>
      %c0_17 = arith.constant 0 : index
      %c0_18 = arith.constant 0 : index
      %19 = vector.load %arg7[%c0_17, %c0_18] : memref<1x128xf32, #tpu.memory_space<vmem>>, vector<1x128xf32>
      tpu.vector_store %arg7[%c0_17, %c0_18], %18 {strides = array<i32>} : memref<1x128xf32, #tpu.memory_space<vmem>>, vector<1x128xf32>,
    } else {
    }
    return
  }
  func.func @transform_0(%arg0: i32) -> (i32, i32) {
    %c0_i32 = arith.constant 0 : i32
    %c0_i32_0 = arith.constant 0 : i32
    return %arg0, %c0_i32 : i32, i32
  }
  func.func @transform_1(%arg0: i32) -> (i32, i32) {
    %c0_i32 = arith.constant 0 : i32
    %c0_i32_0 = arith.constant 0 : i32
    %c0_i32_1 = arith.constant 0 : i32
    return %c0_i32, %c0_i32_0 : i32, i32
  }
  func.func @transform_2(%arg0: i32) -> (i32, i32) {
    %c0_i32 = arith.constant 0 : i32
    %c0_i32_0 = arith.constant 0 : i32
    %c0_i32_1 = arith.constant 0 : i32
    return %c0_i32, %c0_i32_0 : i32, i32
  }
  func.func @transform_3(%arg0: i32) -> (i32, i32) {
    %c0_i32 = arith.constant 0 : i32
    %c0_i32_0 = arith.constant 0 : i32
    %c0_i32_1 = arith.constant 0 : i32
    return %c0_i32, %c0_i32_0 : i32, i32
  }
  func.func @transform_4(%arg0: i32) -> (i32, i32) {
    %c0_i32 = arith.constant 0 : i32
    %c0_i32_0 = arith.constant 0 : i32
    return %arg0, %c0_i32 : i32, i32
  }
  func.func @transform_5(%arg0: i32) -> (i32, i32) {
    %c0_i32 = arith.constant 0 : i32
    %c0_i32_0 = arith.constant 0 : i32
    %c0_i32_1 = arith.constant 0 : i32
    return %c0_i32, %c0_i32_0 : i32, i32
  }
  func.func @transform_6(%arg0: i32) -> (i32, i32) {
    %c0_i32 = arith.constant 0 : i32
    %c0_i32_0 = arith.constant 0 : i32
    %c0_i32_1 = arith.constant 0 : i32
    return %c0_i32, %c0_i32_0 : i32, i32
  }
}

</mosaic_0001>

<llo_original>
// kernel: tpu_custom_call.1
$region0: #{tpu_custom_call.1}
  #allocation0 [shape = 'u32[]', space=smem, size = 0x4, offset = 0x4, fixed_abs, tag = 'smem constant byte address 0x4 - core index']
  #allocation1 [shape = 'u32[144,128]{1,0:T(1,128)}', space=vmem, size = 0x12000, scoped, tag = 'internal scratch']
  #allocation2 [shape = 'f32[1,128]{1,0:T(1,128)}', space=vmem, size = 0x200, scoped, tag = 'scratch operand']
  #allocation3 [shape = 'f32[1,128]{1,0:T(1,128)}', space=vmem, size = 0x200, scoped, tag = 'scratch operand']
  #allocation4 [shape = 'f32[1,1]{1,0:T(1,128)}', space=smem, size = 0x200, scoped, tag = 'scratch operand']
  %s0 = inlined_call_operand.hbm [shape: f32[16,128], index: 0, kind: input, shape index: {}]
  %s1 = inlined_call_operand.hbm [shape: f32[128,128], index: 1, kind: input, shape index: {}]
  %s2 = inlined_call_operand.vmem [shape: f32[1,128], index: 2, kind: input, shape index: {}]
  %s3 = inlined_call_operand.vmem [shape: f32[1,128], index: 3, kind: input, shape index: {}]
  %s4 = inlined_call_operand.hbm [shape: f32[16,128], index: 4, kind: output, shape index: {0}]
  %s5 = inlined_call_operand.hbm [shape: f32[1,128], index: 5, kind: output, shape index: {1}]
  %s6 = inlined_call_operand.hbm [shape: f32[1,128], index: 6, kind: output, shape index: {2}]
  %7 = xla_tuple %s4, %s5, %s6
  %s8 = sld [smem:[#allocation0]]
  $region81: #{tpu_custom_call.1} parent=0
    _
  %s10 = ssub.s32 1, %s8
  %s11 = scalar_select 0, %s10, %s8
  $region1: #{tpu_custom_call.1} parent=0
    #allocation5 [shape = 'u8[8192]{0}', space=vmem, size = 0x2000, scoped, tag = 'input window, operand 0']
    #allocation6 [shape = 's32[2]{0}', space=sflag, size = 0x8, scoped, tag = 'scoped memory for tpu_custom_call.1']
    #allocation7 [shape = 's32[2]{0}', space=sflag, size = 0x8, scoped, tag = 'scoped memory for tpu_custom_call.1']
    #allocation8 [shape = 'u8[65536]{0}', space=vmem, size = 0x10000, scoped, tag = 'input window, operand 1, single buffered']
    #allocation9 [shape = 's32[1]{0}', space=sflag, size = 0x4, scoped, tag = 'scoped memory for tpu_custom_call.1']
    #allocation10 [shape = 'u8[8192]{0}', space=vmem, size = 0x2000, scoped, tag = 'output window, operand 0']
    #allocation11 [shape = 'u8[512]{0}', space=vmem, size = 0x400, scoped, tag = 'output window, operand 1, single buffered']
    #allocation12 [shape = 's32[1]{0}', space=sflag, size = 0x4, scoped, tag = 'scoped memory for tpu_custom_call.1']
    #allocation13 [shape = 'u8[512]{0}', space=vmem, size = 0x400, scoped, tag = 'output window, operand 2, single buffered']
    %12 = vsyncpa [#allocation6], 0
    %s13 = scalar_lea.sflag [#allocation6], 1
    %14 = vsyncpa %s13, 0
    %15 = vsyncpa [#allocation9], 0
    %16 = vsyncpa [#allocation7], 0
    %s17 = scalar_lea.sflag [#allocation7], 1
    %18 = vsyncpa %s17, 0
    %19 = vsyncpa [#allocation12], 0
    loop: start=0, step=1, limit=4
    $region2: #{tpu_custom_call.1} parent=1 // loop_pre_header
      _
    $region3: #{tpu_custom_call.1} parent=1 // loop_header
      %s21 = sphi 0, %s25
      %p22 = scmp.ge.s32.totalorder %s21, 4
      %s31 = sphi 0, %s33
      %s34 = sphi 0, %s31
      %s35 = sphi 0, %s34
      %s51 = sphi 0, %s35
      %s55 = sphi 0, %s55
      %s57 = sphi 0, %s55
      %s58 = sphi 0, %s57
      %s72 = sphi 0, %s58
      %s76 = sphi 0, %s76
      %s78 = sphi 0, %s76
      %s79 = sphi 0, %s78
      %s93 = sphi 0, %s79
      %s97 = sphi 0, %s97
      %s99 = sphi 0, %s97
      %s100 = sphi 0, %s99
      %s114 = sphi 0, %s100
      %s120 = sphi 0, %s122
      %s123 = sphi 0, %s120
      %s124 = sphi 0, %s123
      %s140 = sphi 0, %s124
      %s144 = sphi 0, %s144
      %s146 = sphi 0, %s144
      %s147 = sphi 0, %s146
      %s161 = sphi 0, %s147
      %s165 = sphi 0, %s165
      %s167 = sphi 0, %s165
      %s168 = sphi 0, %s167
      %s182 = sphi 0, %s168
    $region4: #{tpu_custom_call.1} parent=1 // loop_header_branch
      %24 = sbr.rel (%p22) target = $region8
    $region5: #{tpu_custom_call.1} parent=1 // loop_body
      %s26 = ssub.s32 %s21, 1
      %s27 = ssub.s32 %s21, 2
      %s28 = sadd.s32 %s21, 1
      %s29 = ssub.s32 %s21, %s28
      %p30 = scmp.eq.s32.totalorder %s29, 0
      %s32 = sadd.s32 %s31, 1
      %s33 = scalar_select %p30, %s31, %s32
      %p36 = pneg %p30
      %p37 = scmp.eq.s32.totalorder %s21, 1
      %p38 = por %p36, %p37
      %p39 = scmp.ne.s32.totalorder %s31, %s34
      %p40 = scmp.eq.s32.totalorder %s21, 0
      %p41 = por %p39, %p40
      %p42 = scmp.ne.s32.totalorder %s31, %s34
      %p43 = scmp.eq.s32.totalorder %s26, 1
      %p44 = por %p42, %p43
      %p45 = scmp.ne.s32.totalorder %s34, %s35
      %p46 = scmp.eq.s32.totalorder %s26, 0
      %p47 = por %p45, %p46
      %p48 = scmp.ne.s32.totalorder %s34, %s35
      %p49 = scmp.eq.s32.totalorder %s27, 1
      %p50 = por %p48, %p49
      %p52 = scmp.ne.s32.totalorder %s35, %s51
      %p53 = scmp.eq.s32.totalorder %s27, 0
      %p54 = por %p52, %p53
      %s56 = sadd.s32 %s55, 1
      %p59 = scmp.eq.s32.totalorder %s21, 1
      %p60 = scmp.ne.s32.totalorder %s55, %s57
      %p61 = scmp.eq.s32.totalorder %s21, 0
      %p62 = por %p60, %p61
      %p63 = scmp.ne.s32.totalorder %s55, %s57
      %p64 = scmp.eq.s32.totalorder %s26, 1
      %p65 = por %p63, %p64
      %p66 = scmp.ne.s32.totalorder %s57, %s58
      %p67 = scmp.eq.s32.totalorder %s26, 0
      %p68 = por %p66, %p67
      %p69 = scmp.ne.s32.totalorder %s57, %s58
      %p70 = scmp.eq.s32.totalorder %s27, 1
      %p71 = por %p69, %p70
      %p73 = scmp.ne.s32.totalorder %s58, %s72
      %p74 = scmp.eq.s32.totalorder %s27, 0
      %p75 = por %p73, %p74
      %s77 = sadd.s32 %s76, 1
      %p80 = scmp.eq.s32.totalorder %s21, 1
      %p81 = scmp.ne.s32.totalorder %s76, %s78
      %p82 = scmp.eq.s32.totalorder %s21, 0
      %p83 = por %p81, %p82
      %p84 = scmp.ne.s32.totalorder %s76, %s78
      %p85 = scmp.eq.s32.totalorder %s26, 1
      %p86 = por %p84, %p85
      %p87 = scmp.ne.s32.totalorder %s78, %s79
      %p88 = scmp.eq.s32.totalorder %s26, 0
      %p89 = por %p87, %p88
      %p90 = scmp.ne.s32.totalorder %s78, %s79
      %p91 = scmp.eq.s32.totalorder %s27, 1
      %p92 = por %p90, %p91
      %p94 = scmp.ne.s32.totalorder %s79, %s93
      %p95 = scmp.eq.s32.totalorder %s27, 0
      %p96 = por %p94, %p95
      %s98 = sadd.s32 %s97, 1
      %p101 = scmp.eq.s32.totalorder %s21, 1
      %p102 = scmp.ne.s32.totalorder %s97, %s99
      %p103 = scmp.eq.s32.totalorder %s21, 0
      %p104 = por %p102, %p103
      %p105 = scmp.ne.s32.totalorder %s97, %s99
      %p106 = scmp.eq.s32.totalorder %s26, 1
      %p107 = por %p105, %p106
      %p108 = scmp.ne.s32.totalorder %s99, %s100
      %p109 = scmp.eq.s32.totalorder %s26, 0
      %p110 = por %p108, %p109
      %p111 = scmp.ne.s32.totalorder %s99, %s100
      %p112 = scmp.eq.s32.totalorder %s27, 1
      %p113 = por %p111, %p112
      %p115 = scmp.ne.s32.totalorder %s100, %s114
      %p116 = scmp.eq.s32.totalorder %s27, 0
      %p117 = por %p115, %p116
      %s118 = ssub.s32 %s21, %s28
      %p119 = scmp.eq.s32.totalorder %s118, 0
      %s121 = sadd.s32 %s120, 1
      %s122 = scalar_select %p119, %s120, %s121
      %p125 = pneg %p119
      %p126 = scmp.eq.s32.totalorder %s21, 1
      %p127 = por %p125, %p126
      %p128 = scmp.ne.s32.totalorder %s120, %s123
      %p129 = scmp.eq.s32.totalorder %s21, 0
      %p130 = por %p128, %p129
      %p131 = scmp.ne.s32.totalorder %s120, %s123
      %p132 = scmp.eq.s32.totalorder %s26, 1
      %p133 = por %p131, %p132
      %p134 = scmp.ne.s32.totalorder %s123, %s124
      %p135 = scmp.eq.s32.totalorder %s26, 0
      %p136 = por %p134, %p135
      %p137 = scmp.ne.s32.totalorder %s123, %s124
      %p138 = scmp.eq.s32.totalorder %s27, 1
      %p139 = por %p137, %p138
      %p141 = scmp.ne.s32.totalorder %s124, %s140
      %p142 = scmp.eq.s32.totalorder %s27, 0
      %p143 = por %p141, %p142
      %s145 = sadd.s32 %s144, 1
      %p148 = scmp.eq.s32.totalorder %s21, 1
      %p149 = scmp.ne.s32.totalorder %s144, %s146
      %p150 = scmp.eq.s32.totalorder %s21, 0
      %p151 = por %p149, %p150
      %p152 = scmp.ne.s32.totalorder %s144, %s146
      %p153 = scmp.eq.s32.totalorder %s26, 1
      %p154 = por %p152, %p153
      %p155 = scmp.ne.s32.totalorder %s146, %s147
      %p156 = scmp.eq.s32.totalorder %s26, 0
      %p157 = por %p155, %p156
      %p158 = scmp.ne.s32.totalorder %s146, %s147
      %p159 = scmp.eq.s32.totalorder %s27, 1
      %p160 = por %p158, %p159
      %p162 = scmp.ne.s32.totalorder %s147, %s161
      %p163 = scmp.eq.s32.totalorder %s27, 0
      %p164 = por %p162, %p163
      %s166 = sadd.s32 %s165, 1
      %p169 = scmp.eq.s32.totalorder %s21, 1
      %p170 = scmp.ne.s32.totalorder %s165, %s167
      %p171 = scmp.eq.s32.totalorder %s21, 0
      %p172 = por %p170, %p171
      %p173 = scmp.ne.s32.totalorder %s165, %s167
      %p174 = scmp.eq.s32.totalorder %s26, 1
      %p175 = por %p173, %p174
      %p176 = scmp.ne.s32.totalorder %s167, %s168
      %p177 = scmp.eq.s32.totalorder %s26, 0
      %p178 = por %p176, %p177
      %p179 = scmp.ne.s32.totalorder %s167, %s168
      %p180 = scmp.eq.s32.totalorder %s27, 1
      %p181 = por %p179, %p180
      %p183 = scmp.ne.s32.totalorder %s168, %s182
      %p184 = scmp.eq.s32.totalorder %s27, 0
      %p185 = por %p183, %p184
      %p186 = scmp.le.s32.totalorder 1, %s21
      %p187 = scmp.lt.s32.totalorder %s21, 3
      %p188 = pnand %p186, %p187
      %p189 = pneg %p188
      // Predicated region
      $region9: #{tpu_custom_call.1} parent=5 // pred_check
        _
      $region10: #{tpu_custom_call.1} parent=5 // pred_check_branch
        %191 = sbr.rel (%p188) target = $region12
      $region11: #{tpu_custom_call.1} parent=5 // pred_region
        %s192 = ssub.s32 %s21, 1
        // Predicated region
        $region13: #{tpu_custom_call.1} parent=11 // pred_check
          %p193 = pneg %p68
        $region14: #{tpu_custom_call.1} parent=11 // pred_check_branch
          %195 = sbr.rel (%p193) target = $region16
        $region15: #{tpu_custom_call.1} parent=11 // pred_region
          %s197 = ssub.s32 2048, 2048
          %198 = vsyncadd [#allocation9], %s197
          %s199 = sshll.u32 [#allocation8], 4
          %s200 = int_to_ptr.vmem [resolvable:$true] %s199
          %205 = dma.hbm_to_vmem [thread:$0]  %s1, 2048, %s200, [#allocation9], 128, 128, 8
        $region16: #{tpu_custom_call.1} parent=11 // pred_fallthru
          _
        // Predicated region
        $region17: #{tpu_custom_call.1} parent=11 // pred_check
          %p206 = pneg %p89
        $region18: #{tpu_custom_call.1} parent=11 // pred_check_branch
          %208 = sbr.rel (%p206) target = $region20
        $region19: #{tpu_custom_call.1} parent=11 // pred_region
          _
        $region20: #{tpu_custom_call.1} parent=11 // pred_fallthru
          _
        // Predicated region
        $region21: #{tpu_custom_call.1} parent=11 // pred_check
          %p209 = pneg %p110
        $region22: #{tpu_custom_call.1} parent=11 // pred_check_branch
          %211 = sbr.rel (%p209) target = $region24
        $region23: #{tpu_custom_call.1} parent=11 // pred_region
          _
        $region24: #{tpu_custom_call.1} parent=11 // pred_fallthru
          _
      $region12: #{tpu_custom_call.1} parent=5 // pred_fallthru
        _
      %p212 = scmp.lt.s32.totalorder %s21, 2
      // Predicated region
      $region25: #{tpu_custom_call.1} parent=5 // pred_check
        %p213 = pneg %p212
      $region26: #{tpu_custom_call.1} parent=5 // pred_check_branch
        %215 = sbr.rel (%p213) target = $region28
      $region27: #{tpu_custom_call.1} parent=5 // pred_region
        // Predicated region
        $region29: #{tpu_custom_call.1} parent=27 // pred_check
          %p216 = pneg %p41
        $region30: #{tpu_custom_call.1} parent=27 // pred_check_branch
          %218 = sbr.rel (%p216) target = $region32
        $region31: #{tpu_custom_call.1} parent=27 // pred_region
          %s219 = sand.u32 %s31, 1
          %s220 = scalar_lea.sflag [#allocation6], %s219
          %s221 = sand.u32 %s31, 1
          %s222 = smul.addr %s221, 8
          %s223 = scalar_lea.vmem [#allocation5], %s222
          %s225 = ssub.s32 128, 128
          %226 = vsyncadd %s220, %s225
          %s227 = smul.addr %s21, 128
          %s228 = scalar_lea.hbm %s0, %s227
          %s230 = sshll.u32 %s223, 4
          %s231 = int_to_ptr.vmem [resolvable:$true] %s230
          %233 = dma.hbm_to_vmem [thread:$0]  %s228, 128, %s231, %s220
        $region32: #{tpu_custom_call.1} parent=27 // pred_fallthru
          _
      $region28: #{tpu_custom_call.1} parent=5 // pred_fallthru
        _
      %p234 = scmp.le.s32.totalorder 1, %s21
      %p235 = scmp.lt.s32.totalorder %s21, 3
      %p236 = pnand %p234, %p235
      %p237 = pneg %p236
      // Predicated region
      $region33: #{tpu_custom_call.1} parent=5 // pred_check
        _
      $region34: #{tpu_custom_call.1} parent=5 // pred_check_branch
        %239 = sbr.rel (%p236) target = $region36
      $region35: #{tpu_custom_call.1} parent=5 // pred_region
        %s240 = ssub.s32 %s21, 1
        %s241 = sand.u32 %s34, 1
        %s242 = scalar_lea.sflag [#allocation6], %s241
        %s243 = sand.u32 %s34, 1
        %s244 = smul.addr %s243, 8
        %s245 = scalar_lea.vmem [#allocation5], %s244
        // Predicated region
        $region37: #{tpu_custom_call.1} parent=35 // pred_check
          %p246 = pneg %p47
        $region38: #{tpu_custom_call.1} parent=35 // pred_check_branch
          %248 = sbr.rel (%p246) target = $region40
        $region39: #{tpu_custom_call.1} parent=35 // pred_region
          %249 = dma.done %s242, 128
        $region40: #{tpu_custom_call.1} parent=35 // pred_fallthru
          _
        // Predicated region
        $region41: #{tpu_custom_call.1} parent=35 // pred_check
          %p250 = pneg %p68
        $region42: #{tpu_custom_call.1} parent=35 // pred_check_branch
          %252 = sbr.rel (%p250) target = $region44
        $region43: #{tpu_custom_call.1} parent=35 // pred_region
          %253 = dma.done [#allocation9], 2048
        $region44: #{tpu_custom_call.1} parent=35 // pred_fallthru
          _
        %s254 = sand.u32 %s34, 1
        %s255 = scalar_lea.sflag [#allocation6], %s254
        %s256 = sand.u32 %s34, 1
        %s257 = smul.addr %s256, 8
        %s258 = scalar_lea.vmem [#allocation5], %s257
        %p259 = pneg %p47
        %p260 = pneg %p44
        %p261 = pneg %p68
        %p262 = pneg %p65
        %p263 = pneg %p89
        %p264 = pneg %p86
        %p265 = pneg %p110
        %p266 = pneg %p107
        %p267 = pneg %p136
        %p268 = pneg %p133
        %s269 = sand.u32 %s123, 1
        %s270 = scalar_lea.sflag [#allocation7], %s269
        %s271 = sand.u32 %s123, 1
        %s272 = smul.addr %s271, 8
        %s273 = scalar_lea.vmem [#allocation10], %s272
        %p274 = pneg %p157
        %p275 = pneg %p154
        %p276 = pneg %p178
        %p277 = pneg %p175
        %p278 = scmp.eq.s32.totalorder %s26, 0
        // Predicated region
        $region45: #{tpu_custom_call.1} parent=35 // pred_check
          %p279 = pneg %p278
        $region46: #{tpu_custom_call.1} parent=35 // pred_check_branch
          %281 = sbr.rel (%p279) target = $region48
        $region47: #{tpu_custom_call.1} parent=35 // pred_region
          %v282 = vld [vmem:[#allocation8] sm:$0xff]
          %v283 = vld [vmem:[#allocation8 + $0x8] sm:$0xff]
          %v284 = vld [vmem:[#allocation8 + $0x10] sm:$0xff]
          %v285 = vld [vmem:[#allocation8 + $0x18] sm:$0xff]
          %v286 = vld [vmem:[#allocation8 + $0x20] sm:$0xff]
          %v287 = vld [vmem:[#allocation8 + $0x28] sm:$0xff]
          %v288 = vld [vmem:[#allocation8 + $0x30] sm:$0xff]
          %v289 = vld [vmem:[#allocation8 + $0x38] sm:$0xff]
          %v290 = vld [vmem:[#allocation8 + $0x40] sm:$0xff]
          %v291 = vld [vmem:[#allocation8 + $0x48] sm:$0xff]
          %v292 = vld [vmem:[#allocation8 + $0x50] sm:$0xff]
          %v293 = vld [vmem:[#allocation8 + $0x58] sm:$0xff]
          %v294 = vld [vmem:[#allocation8 + $0x60] sm:$0xff]
          %v295 = vld [vmem:[#allocation8 + $0x68] sm:$0xff]
          %v296 = vld [vmem:[#allocation8 + $0x70] sm:$0xff]
          %v297 = vld [vmem:[#allocation8 + $0x78] sm:$0xff]
          %v298 = vld [vmem:[%s2] sm:$0x1]
          %299 = vmatprep.subr.mxu0 0.0
          %300 = vmatpush1.xpose.msra.mxu0 %v282
          %301 = vmatprep.subr.mxu0 0.0
          %302 = vmatpush1.xpose.msra.mxu0 %v283
          %303 = vmatprep.subr.mxu0 0.0
          %304 = vmatpush1.xpose.msra.mxu0 %v284
          %305 = vmatprep.subr.mxu0 0.0
          %306 = vmatpush1.xpose.msra.mxu0 %v285
          %307 = vmatprep.subr.mxu0 0.0
          %308 = vmatpush1.xpose.msra.mxu0 %v286
          %309 = vmatprep.subr.mxu0 0.0
          %310 = vmatpush1.xpose.msra.mxu0 %v287
          %311 = vmatprep.subr.mxu0 0.0
          %312 = vmatpush1.xpose.msra.mxu0 %v288
          %313 = vmatprep.subr.mxu0 0.0
          %314 = vmatpush1.xpose.msra.mxu0 %v289
          %315 = vmatprep.subr.mxu0 0.0
          %316 = vmatpush1.xpose.msra.mxu0 %v290
          %317 = vmatprep.subr.mxu0 0.0
          %318 = vmatpush1.xpose.msra.mxu0 %v291
          %319 = vmatprep.subr.mxu0 0.0
          %320 = vmatpush1.xpose.msra.mxu0 %v292
          %321 = vmatprep.subr.mxu0 0.0
          %322 = vmatpush1.xpose.msra.mxu0 %v293
          %323 = vmatprep.subr.mxu0 0.0
          %324 = vmatpush1.xpose.msra.mxu0 %v294
          %325 = vmatprep.subr.mxu0 0.0
          %326 = vmatpush1.xpose.msra.mxu0 %v295
          %327 = vmatprep.subr.mxu0 0.0
          %328 = vmatpush1.xpose.msra.mxu0 %v296
          %329 = vmatprep.subr.mxu0 0.0
          %330 = vmatpush1.xpose.msra.mxu0 %v297
          %331 = vmatprep.subr.mxu0 0.0
          %332 = vmatpush1.xpose.msra.mxu0 0.0
          %333 = vmatprep.subr.mxu0 0.0
          %334 = vmatpush1.xpose.msra.mxu0 0.0
          %335 = vmatprep.subr.mxu0 0.0
          %336 = vmatpush1.xpose.msra.mxu0 0.0
          %337 = vmatprep.subr.mxu0 0.0
          %338 = vmatpush1.xpose.msra.mxu0 0.0
          %339 = vmatprep.subr.mxu0 0.0
          %340 = vmatpush1.xpose.msra.mxu0 0.0
          %341 = vmatprep.subr.mxu0 0.0
          %342 = vmatpush1.xpose.msra.mxu0 0.0
          %343 = vmatprep.subr.mxu0 0.0
          %344 = vmatpush1.xpose.msra.mxu0 0.0
          %345 = vmatprep.subr.mxu0 0.0
          %346 = vmatpush1.xpose.msra.mxu0 0.0
          %347 = vmatprep.subr.mxu0 0.0
          %348 = vmatpush1.xpose.msra.mxu0 0.0
          %349 = vmatprep.subr.mxu0 0.0
          %350 = vmatpush1.xpose.msra.mxu0 0.0
          %351 = vmatprep.subr.mxu0 0.0
          %352 = vmatpush1.xpose.msra.mxu0 0.0
          %353 = vmatprep.subr.mxu0 0.0
          %354 = vmatpush1.xpose.msra.mxu0 0.0
          %355 = vmatprep.subr.mxu0 0.0
          %356 = vmatpush1.xpose.msra.mxu0 0.0
          %357 = vmatprep.subr.mxu0 0.0
          %358 = vmatpush1.xpose.msra.mxu0 0.0
          %359 = vmatprep.subr.mxu0 0.0
          %360 = vmatpush1.xpose.msra.mxu0 0.0
          %361 = vmatprep.subr.mxu0 0.0
          %362 = vmatpush1.xpose.msra.mxu0 0.0
          %363 = vmatprep.mubr.f32.mxu0 0.0
          %364 = vmatmul.mubr.f32.gmra.mrb[0].mxu0 %v298
          %v365 = vpop.f32.mrb[0].mxu0
          %v366 = vadd.f32 0.0, %v365
          %v367 = vpop.f32.mrb[0].mxu0
          %368 = vdwg.mxu0
          %v369 = vmul.f32 %v366, %v366
          %vm370 = vcmask 1040384
          %v371 = vsel %vm370, %v369, 0.0
          %372 = vadd.xlane.f32.xlu0 %v371
          %v373 = vpop.xlane.xlu0 %372
          %v374 = vrot.slane %v373, 4
          %v375 = vadd.f32 %v373, %v374
          %v376 = vrot.slane %v375, 2
          %v377 = vadd.f32 %v375, %v376
          %v378 = vrot.slane %v377, 1
          %v379 = vadd.f32 %v377, %v378
          %s380 = vtos %v379
          %v381 = vstv %s380
          %v382 = vrsqrt.pop %v381
          %v383 = vmul.f32 %v381, %v382
          %vm384 = vcmp.eq.f32.partialorder %v381, inf
          %v385 = vsel %vm384, %v381, %v383
          %vm386 = vcmp.eq.f32.partialorder %v381, 0.0
          %v387 = vand.u32 %v381, 2147483648
          %v388 = vsel %vm386, %v387, %v385
          %s389 = vtos %v388
          %s390 = sadd.f32 %s389, 1e-12
          %v391 = vstv %s390
          %v392 = vrcp.pop %v391
          %s393 = vtos %v392
          %v394 = vstv %s393
          %v395 = vmul.f32 %v366, %v394
          %396 = vmatprep.subr.mxu0 0.0
          %397 = vmatpush1.msra.mxu0 %v282
          %398 = vmatprep.subr.mxu0 0.0
          %399 = vmatpush1.msra.mxu0 %v283
          %400 = vmatprep.subr.mxu0 0.0
          %401 = vmatpush1.msra.mxu0 %v284
          %402 = vmatprep.subr.mxu0 0.0
          %403 = vmatpush1.msra.mxu0 %v285
          %404 = vmatprep.subr.mxu0 0.0
          %405 = vmatpush1.msra.mxu0 %v286
          %406 = vmatprep.subr.mxu0 0.0
          %407 = vmatpush1.msra.mxu0 %v287
          %408 = vmatprep.subr.mxu0 0.0
          %409 = vmatpush1.msra.mxu0 %v288
          %410 = vmatprep.subr.mxu0 0.0
          %411 = vmatpush1.msra.mxu0 %v289
          %412 = vmatprep.subr.mxu0 0.0
          %413 = vmatpush1.msra.mxu0 %v290
          %414 = vmatprep.subr.mxu0 0.0
          %415 = vmatpush1.msra.mxu0 %v291
          %416 = vmatprep.subr.mxu0 0.0
          %417 = vmatpush1.msra.mxu0 %v292
          %418 = vmatprep.subr.mxu0 0.0
          %419 = vmatpush1.msra.mxu0 %v293
          %420 = vmatprep.subr.mxu0 0.0
          %421 = vmatpush1.msra.mxu0 %v294
          %422 = vmatprep.subr.mxu0 0.0
          %423 = vmatpush1.msra.mxu0 %v295
          %424 = vmatprep.subr.mxu0 0.0
          %425 = vmatpush1.msra.mxu0 %v296
          %426 = vmatprep.subr.mxu0 0.0
          %427 = vmatpush1.msra.mxu0 %v297
          %428 = vmatprep.subr.mxu0 0.0
          %429 = vmatpush1.msra.mxu0 0.0
          %430 = vmatprep.subr.mxu0 0.0
          %431 = vmatpush1.msra.mxu0 0.0
          %432 = vmatprep.subr.mxu0 0.0
          %433 = vmatpush1.msra.mxu0 0.0
          %434 = vmatprep.subr.mxu0 0.0
          %435 = vmatpush1.msra.mxu0 0.0
          %436 = vmatprep.subr.mxu0 0.0
          %437 = vmatpush1.msra.mxu0 0.0
          %438 = vmatprep.subr.mxu0 0.0
          %439 = vmatpush1.msra.mxu0 0.0
          %440 = vmatprep.subr.mxu0 0.0
          %441 = vmatpush1.msra.mxu0 0.0
          %442 = vmatprep.subr.mxu0 0.0
          %443 = vmatpush1.msra.mxu0 0.0
          %444 = vmatprep.subr.mxu0 0.0
          %445 = vmatpush1.msra.mxu0 0.0
          %446 = vmatprep.subr.mxu0 0.0
          %447 = vmatpush1.msra.mxu0 0.0
          %448 = vmatprep.subr.mxu0 0.0
          %449 = vmatpush1.msra.mxu0 0.0
          %450 = vmatprep.subr.mxu0 0.0
          %451 = vmatpush1.msra.mxu0 0.0
          %452 = vmatprep.subr.mxu0 0.0
          %453 = vmatpush1.msra.mxu0 0.0
          %454 = vmatprep.subr.mxu0 0.0
          %455 = vmatpush1.msra.mxu0 0.0
          %456 = vmatprep.subr.mxu0 0.0
          %457 = vmatpush1.msra.mxu0 0.0
          %458 = vmatprep.subr.mxu0 0.0
          %459 = vmatpush1.msra.mxu0 0.0
          %460 = vmatprep.mubr.f32.mxu0 0.0
          %461 = vmatmul.mubr.f32.gmra.mrb[0].mxu0 %v395
          %v462 = vpop.f32.mrb[0].mxu0
          %v463 = vadd.f32 0.0, %v462
          %v464 = vpop.f32.mrb[0].mxu0
          %465 = vdwg.mxu0
          %v466 = vmul.f32 %v463, %v463
          %v467 = vsel %vm370, %v466, 0.0
          %468 = vadd.xlane.f32.xlu0 %v467
          %v469 = vpop.xlane.xlu0 %468
          %v470 = vrot.slane %v469, 4
          %v471 = vadd.f32 %v469, %v470
          %v472 = vrot.slane %v471, 2
          %v473 = vadd.f32 %v471, %v472
          %v474 = vrot.slane %v473, 1
          %v475 = vadd.f32 %v473, %v474
          %s476 = vtos %v475
          %v477 = vstv %s476
          %v478 = vrsqrt.pop %v477
          %v479 = vmul.f32 %v477, %v478
          %vm480 = vcmp.eq.f32.partialorder %v477, inf
          %v481 = vsel %vm480, %v477, %v479
          %vm482 = vcmp.eq.f32.partialorder %v477, 0.0
          %v483 = vand.u32 %v477, 2147483648
          %v484 = vsel %vm482, %v483, %v481
          %s485 = vtos %v484
          %s486 = sadd.f32 %s485, 1e-12
          %v487 = vstv %s486
          %v488 = vrcp.pop %v487
          %s489 = vtos %v488
          %v490 = vstv %s489
          %v491 = vmul.f32 %v463, %v490
          %v492 = vmul.f32 %v491, %v463
          %v493 = vsel %vm370, %v492, 0.0
          %494 = vadd.xlane.f32.xlu0 %v493
          %v495 = vpop.xlane.xlu0 %494
          %v496 = vrot.slane %v495, 4
          %v497 = vadd.f32 %v495, %v496
          %v498 = vrot.slane %v497, 2
          %v499 = vadd.f32 %v497, %v498
          %v500 = vrot.slane %v499, 1
          %v501 = vadd.f32 %v499, %v500
          %s502 = vtos %v501
          %v503 = vstv %s502
          %v504 = vrcp.pop %v503
          %s505 = vtos %v504
          %s506 = scalar_lea.smem [#allocation4], 0
          %507 = sst [smem:[%s506]] %s505
          %508 = vst [vmem:[#allocation2] sm:$0x1] %v491
          %509 = vst [vmem:[#allocation3] sm:$0x1] %v395
        $region48: #{tpu_custom_call.1} parent=35 // pred_fallthru
          _
        %v510 = vld [vmem:[%s245] sm:$0xff]
        %v511 = vld [vmem:[#allocation8] sm:$0xff]
        %v512 = vld [vmem:[#allocation8 + $0x8] sm:$0xff]
        %v513 = vld [vmem:[#allocation8 + $0x10] sm:$0xff]
        %v514 = vld [vmem:[#allocation8 + $0x18] sm:$0xff]
        %v515 = vld [vmem:[#allocation8 + $0x20] sm:$0xff]
        %v516 = vld [vmem:[#allocation8 + $0x28] sm:$0xff]
        %v517 = vld [vmem:[#allocation8 + $0x30] sm:$0xff]
        %v518 = vld [vmem:[#allocation8 + $0x38] sm:$0xff]
        %v519 = vld [vmem:[#allocation8 + $0x40] sm:$0xff]
        %v520 = vld [vmem:[#allocation8 + $0x48] sm:$0xff]
        %v521 = vld [vmem:[#allocation8 + $0x50] sm:$0xff]
        %v522 = vld [vmem:[#allocation8 + $0x58] sm:$0xff]
        %v523 = vld [vmem:[#allocation8 + $0x60] sm:$0xff]
        %v524 = vld [vmem:[#allocation8 + $0x68] sm:$0xff]
        %v525 = vld [vmem:[#allocation8 + $0x70] sm:$0xff]
        %v526 = vld [vmem:[#allocation8 + $0x78] sm:$0xff]
        %527 = vmatprep.subr.mxu0 0.0
        %528 = vmatpush1.msra.mxu0 %v511
        %529 = vmatprep.subr.mxu0 0.0
        %530 = vmatpush1.msra.mxu0 %v512
        %531 = vmatprep.subr.mxu0 0.0
        %532 = vmatpush1.msra.mxu0 %v513
        %533 = vmatprep.subr.mxu0 0.0
        %534 = vmatpush1.msra.mxu0 %v514
        %535 = vmatprep.subr.mxu0 0.0
        %536 = vmatpush1.msra.mxu0 %v515
        %537 = vmatprep.subr.mxu0 0.0
        %538 = vmatpush1.msra.mxu0 %v516
        %539 = vmatprep.subr.mxu0 0.0
        %540 = vmatpush1.msra.mxu0 %v517
        %541 = vmatprep.subr.mxu0 0.0
        %542 = vmatpush1.msra.mxu0 %v518
        %543 = vmatprep.subr.mxu0 0.0
        %544 = vmatpush1.msra.mxu0 %v519
        %545 = vmatprep.subr.mxu0 0.0
        %546 = vmatpush1.msra.mxu0 %v520
        %547 = vmatprep.subr.mxu0 0.0
        %548 = vmatpush1.msra.mxu0 %v521
        %549 = vmatprep.subr.mxu0 0.0
        %550 = vmatpush1.msra.mxu0 %v522
        %551 = vmatprep.subr.mxu0 0.0
        %552 = vmatpush1.msra.mxu0 %v523
        %553 = vmatprep.subr.mxu0 0.0
        %554 = vmatpush1.msra.mxu0 %v524
        %555 = vmatprep.subr.mxu0 0.0
        %556 = vmatpush1.msra.mxu0 %v525
        %557 = vmatprep.subr.mxu0 0.0
        %558 = vmatpush1.msra.mxu0 %v526
        %559 = vmatprep.subr.mxu0 0.0
        %560 = vmatpush1.msra.mxu0 0.0
        %561 = vmatprep.subr.mxu0 0.0
        %562 = vmatpush1.msra.mxu0 0.0
        %563 = vmatprep.subr.mxu0 0.0
        %564 = vmatpush1.msra.mxu0 0.0
        %565 = vmatprep.subr.mxu0 0.0
        %566 = vmatpush1.msra.mxu0 0.0
        %567 = vmatprep.subr.mxu0 0.0
        %568 = vmatpush1.msra.mxu0 0.0
        %569 = vmatprep.subr.mxu0 0.0
        %570 = vmatpush1.msra.mxu0 0.0
        %571 = vmatprep.subr.mxu0 0.0
        %572 = vmatpush1.msra.mxu0 0.0
        %573 = vmatprep.subr.mxu0 0.0
        %574 = vmatpush1.msra.mxu0 0.0
        %575 = vmatprep.subr.mxu0 0.0
        %576 = vmatpush1.msra.mxu0 0.0
        %577 = vmatprep.subr.mxu0 0.0
        %578 = vmatpush1.msra.mxu0 0.0
        %579 = vmatprep.subr.mxu0 0.0
        %580 = vmatpush1.msra.mxu0 0.0
        %581 = vmatprep.subr.mxu0 0.0
        %582 = vmatpush1.msra.mxu0 0.0
        %583 = vmatprep.subr.mxu0 0.0
        %584 = vmatpush1.msra.mxu0 0.0
        %585 = vmatprep.subr.mxu0 0.0
        %586 = vmatpush1.msra.mxu0 0.0
        %587 = vmatprep.subr.mxu0 0.0
        %588 = vmatpush1.msra.mxu0 0.0
        %589 = vmatprep.subr.mxu0 0.0
        %590 = vmatpush1.msra.mxu0 0.0
        %591 = vmatprep.mubr.f32.mxu0 0.0
        %592 = vmatmul.mubr.f32.gmra.mrb[0].mxu0 %v510
        %v593 = vpop.f32.mrb[0].mxu0
        %v594 = vadd.f32 0.0, %v593
        %v595 = vpop.f32.mrb[0].mxu0
        %596 = vdwg.mxu0
        %s597 = sld [smem:[#allocation4]]
        %v598 = vstv %s597
        %v599 = vmul.f32 %v594, %v598
        %v600 = vld [vmem:[%s3] sm:$0x1]
        %v602 = vlaneseq
        %v603 = vshrl.u32 %v602, 7
        %v604 = vsub.s32 0, %v603
        %v605 = vrot.slane %v600, %v604
        %v607 = vadd.f32 %v599, %v605
        %608 = vst [vmem:[%s273] sm:$0xff] %v607
        %p609 = scmp.eq.s32.totalorder %s26, 1
        // Predicated region
        $region49: #{tpu_custom_call.1} parent=35 // pred_check
          %p610 = pneg %p609
        $region50: #{tpu_custom_call.1} parent=35 // pred_check_branch
          %612 = sbr.rel (%p610) target = $region52
        $region51: #{tpu_custom_call.1} parent=35 // pred_region
          %v613 = vld [vmem:[#allocation2] sm:$0x1]
          %614 = vst [vmem:[#allocation11] sm:$0x1] %v613
          %v615 = vld [vmem:[#allocation3] sm:$0x1]
          %616 = vst [vmem:[#allocation13] sm:$0x1] %v615
        $region52: #{tpu_custom_call.1} parent=35 // pred_fallthru
          _
        %s617 = sand.u32 %s123, 1
        %s618 = scalar_lea.sflag [#allocation7], %s617
        %s619 = sand.u32 %s123, 1
        %s620 = smul.addr %s619, 8
        %s621 = scalar_lea.vmem [#allocation10], %s620
        // Predicated region
        $region53: #{tpu_custom_call.1} parent=35 // pred_check
          %p622 = pneg %p133
        $region54: #{tpu_custom_call.1} parent=35 // pred_check_branch
          %624 = sbr.rel (%p622) target = $region56
        $region55: #{tpu_custom_call.1} parent=35 // pred_region
          %s626 = ssub.s32 128, 128
          %627 = vsyncadd %s618, %s626
          %s628 = smul.addr %s26, 128
          %s629 = scalar_lea.hbm %s4, %s628
          %s631 = sshll.u32 %s621, 4
          %s632 = int_to_ptr.vmem [resolvable:$true] %s631
          %634 = dma.vmem_to_hbm [thread:$0]  %s632, 128, %s629, %s618
        $region56: #{tpu_custom_call.1} parent=35 // pred_fallthru
          _
        // Predicated region
        $region57: #{tpu_custom_call.1} parent=35 // pred_check
          %p635 = pneg %p154
        $region58: #{tpu_custom_call.1} parent=35 // pred_check_branch
          %637 = sbr.rel (%p635) target = $region60
        $region59: #{tpu_custom_call.1} parent=35 // pred_region
          %s639 = ssub.s32 16, 16
          %640 = vsyncadd [#allocation12], %s639
          %s642 = sshll.u32 [#allocation11], 4
          %s643 = int_to_ptr.vmem [resolvable:$true] %s642
          %645 = dma.vmem_to_hbm [thread:$0]  %s643, 16, %s5, [#allocation12]
        $region60: #{tpu_custom_call.1} parent=35 // pred_fallthru
          _
        // Predicated region
        $region61: #{tpu_custom_call.1} parent=35 // pred_check
          %p646 = pneg %p175
        $region62: #{tpu_custom_call.1} parent=35 // pred_check_branch
          %648 = sbr.rel (%p646) target = $region64
        $region63: #{tpu_custom_call.1} parent=35 // pred_region
          %s650 = ssub.s32 16, 16
          %651 = vsyncadd [#allocation12], %s650
          %s653 = sshll.u32 [#allocation13], 4
          %s654 = int_to_ptr.vmem [resolvable:$true] %s653
          %656 = dma.vmem_to_hbm [thread:$0]  %s654, 16, %s6, [#allocation12]
        $region64: #{tpu_custom_call.1} parent=35 // pred_fallthru
          _
        // Predicated region
        $region65: #{tpu_custom_call.1} parent=35 // pred_check
          %p657 = pneg %p154
        $region66: #{tpu_custom_call.1} parent=35 // pred_check_branch
          %659 = sbr.rel (%p657) target = $region68
        $region67: #{tpu_custom_call.1} parent=35 // pred_region
          %660 = dma.done [#allocation12], 16
        $region68: #{tpu_custom_call.1} parent=35 // pred_fallthru
          _
        // Predicated region
        $region69: #{tpu_custom_call.1} parent=35 // pred_check
          %p661 = pneg %p175
        $region70: #{tpu_custom_call.1} parent=35 // pred_check_branch
          %663 = sbr.rel (%p661) target = $region72
        $region71: #{tpu_custom_call.1} parent=35 // pred_region
          %664 = dma.done [#allocation12], 16
        $region72: #{tpu_custom_call.1} parent=35 // pred_fallthru
          _
      $region36: #{tpu_custom_call.1} parent=5 // pred_fallthru
        _
      %p665 = scmp.le.s32.totalorder 2, %s21
      // Predicated region
      $region73: #{tpu_custom_call.1} parent=5 // pred_check
        %p666 = pneg %p665
      $region74: #{tpu_custom_call.1} parent=5 // pred_check_branch
        %668 = sbr.rel (%p666) target = $region76
      $region75: #{tpu_custom_call.1} parent=5 // pred_region
        %s669 = ssub.s32 %s21, 2
        // Predicated region
        $region77: #{tpu_custom_call.1} parent=75 // pred_check
          %p670 = pneg %p139
        $region78: #{tpu_custom_call.1} parent=75 // pred_check_branch
          %672 = sbr.rel (%p670) target = $region80
        $region79: #{tpu_custom_call.1} parent=75 // pred_region
          %s673 = sand.u32 %s124, 1
          %s674 = scalar_lea.sflag [#allocation7], %s673
          %s675 = sand.u32 %s124, 1
          %s676 = smul.addr %s675, 8
          %s677 = scalar_lea.vmem [#allocation10], %s676
          %678 = dma.done %s674, 128
        $region80: #{tpu_custom_call.1} parent=75 // pred_fallthru
          _
      $region76: #{tpu_custom_call.1} parent=5 // pred_fallthru
        _
    $region6: #{tpu_custom_call.1} parent=1 // loop_footer
      %s25 = sadd.s32 1, %s21
    $region7: #{tpu_custom_call.1} parent=1 // loop_footer_branch
      %20 = sbr.rel target = $region3
    $region8: #{tpu_custom_call.1} parent=1 // loop_exit
      _
    %679 = vsyncpa [#allocation6], 1
    %s680 = scalar_lea.sflag [#allocation6], 1
    %681 = vsyncpa %s680, 1
    %682 = vsyncpa [#allocation9], 1
    %683 = vsyncpa [#allocation7], 1
    %s684 = scalar_lea.sflag [#allocation7], 1
    %685 = vsyncpa %s684, 1
    %686 = vsyncpa [#allocation12], 1

</llo_original>
